<compile_context>
chip_gen: v5e
topology: v5e:2x2
jax: 0.10.0
libtpu: 0.0.40
codegen_flags: <defaults>
</compile_context>

<pallas_src>
import jax
import jax.numpy as jnp
from jax.experimental import pallas as pl
from jax.experimental.pallas import tpu as pltpu


def _round_up(x, m):
    return ((x + m - 1) // m) * m


def _vmem_capacity_bytes():
    try:
        return int(pltpu.get_tpu_info().vmem_capacity_bytes)
    except Exception:
        return 64 * 2**20  # conservative (v7x) default


# ---------------------------------------------------------------------------
# Kernels
# ---------------------------------------------------------------------------

def _perturbed_linear_kernel_1k(x_ref, w_ref, b_ref, mask_ref, pert_ref, o_ref):
    """Single reduction step: full K per tile. No scratch, no branches."""
    y = jnp.dot(x_ref[...], w_ref[...], preferred_element_type=jnp.float32)
    y = y + b_ref[...]                                  # (1, tn) broadcasts over rows
    y = jnp.where(mask_ref[...] > 0, pert_ref[...], y)  # out[..., coords] = values
    o_ref[...] = y.astype(o_ref.dtype)


def _perturbed_linear_kernel_kacc(x_ref, w_ref, b_ref, mask_ref, pert_ref, o_ref):
    """Tiled K, f32 output: accumulate directly into the resident o_ref block."""
    k = pl.program_id(2)

    @pl.when(k == 0)
    def _():
        o_ref[...] = jnp.zeros_like(o_ref)

    o_ref[...] += jnp.dot(x_ref[...], w_ref[...], preferred_element_type=jnp.float32)

    @pl.when(k == pl.num_programs(2) - 1)
    def _():
        y = o_ref[...] + b_ref[...]
        o_ref[...] = jnp.where(mask_ref[...] > 0, pert_ref[...], y)


def _perturbed_linear_kernel_kscratch(x_ref, w_ref, b_ref, mask_ref, pert_ref,
                                      o_ref, acc_ref):
    """Tiled K, non-f32 output: f32 scratch accumulator, cast on the last step."""
    k = pl.program_id(2)

    @pl.when(k == 0)
    def _():
        acc_ref[...] = jnp.zeros_like(acc_ref)

    acc_ref[...] += jnp.dot(x_ref[...], w_ref[...], preferred_element_type=jnp.float32)

    @pl.when(k == pl.num_programs(2) - 1)
    def _():
        y = acc_ref[...] + b_ref[...]
        y = jnp.where(mask_ref[...] > 0, pert_ref[...], y)
        o_ref[...] = y.astype(o_ref.dtype)


# ---------------------------------------------------------------------------
# Wrapper
# ---------------------------------------------------------------------------

def perturbed_linear(x, w, b, coords=None, values=None, *,
                     out_dtype=jnp.float32, compute_dtype=jnp.bfloat16):
    """PerturbedLayer(Linear) forward: out = x @ w + b; out[..., coords] = values.

    x: (B, S, K); w: (K, N); b: (N,); coords: int indices into the last dim;
    values: scalar or per-coordinate values (PyTorch fancy-index assignment).
    NOTE: coords are assumed unique (PyTorch keeps the last write for duplicate
    indices; jnp scatter-set leaves the winner unspecified).
    """
    B, S, K = x.shape
    N = w.shape[1]
    M = B * S

    in_itemsize = jnp.dtype(compute_dtype).itemsize
    out_itemsize = jnp.dtype(out_dtype).itemsize
    out_is_f32 = jnp.dtype(out_dtype) == jnp.dtype(jnp.float32)

    vmem_cap = _vmem_capacity_bytes()
    big_vmem = vmem_cap >= 96 * 2**20                 # v5e / v6e (128 MiB VMEM)
    budget = int(vmem_cap * 0.75) if big_vmem else 48 * 2**20   # v7x: <=48 MiB tiles

    # --- reduction (K) tiling -------------------------------------------------
    # Moderate K: one reduction step, no k grid axis. tk == K is always legal
    # (block equals the full array dim), so no K padding either.
    if K <= 4096:
        tk, Kp = K, K
    else:
        tk = 1024 if big_vmem else 512
        Kp = _round_up(K, tk)
    multi_k = (Kp // tk) > 1

    # --- row (M) tiling: bf16 packs 16 rows per vreg ---------------------------
    tm_max = 1024 if big_vmem else 512
    tm = min(tm_max, _round_up(M, 16))

    # --- column (N) tiling ------------------------------------------------------
    tn_max = 2048 if big_vmem else 1024
    tn = min(tn_max, _round_up(N, 128))
    # Thin M: make sure there are >= 2 column tiles when N allows, so both v7x
    # TensorCores get a "parallel" grid slice (no-op on 1-TC chips).
    if M <= tm:
        two_way = _round_up((N + 1) // 2, 128)
        if 128 <= two_way < tn:
            tn = two_way

    # --- keep double-buffered tiles inside the per-generation VMEM budget ------
    def tile_bytes(tm_, tn_):
        byt = 2 * (tm_ * tk + tk * tn_) * in_itemsize     # x / w double buffers
        byt += 2 * tm_ * tn_ * out_itemsize               # output double buffer
        if multi_k and not out_is_f32:
            byt += tm_ * tn_ * 4                          # f32 scratch accumulator
        byt += 8 * tn_ * 4                                # bias / mask / values rows
        return byt

    while tile_bytes(tm, tn) > budget and tn > 256:
        tn = max(256, (tn // 2) // 128 * 128)
    while tile_bytes(tm, tn) > budget and tm > 256:
        tm = max(256, (tm // 2) // 16 * 16)

    Mp = _round_up(M, tm)
    Np = _round_up(N, tn)

    # --- wrapper glue: cast / pad only when actually needed --------------------
    x2d = x.reshape(M, K)
    if x2d.dtype != jnp.dtype(compute_dtype):
        x2d = x2d.astype(compute_dtype)
    if (Mp, Kp) != (M, K):
        x2d = jnp.pad(x2d, ((0, Mp - M), (0, Kp - K)))

    w_p = w if w.dtype == jnp.dtype(compute_dtype) else w.astype(compute_dtype)
    if (Kp, Np) != (K, N):
        w_p = jnp.pad(w_p, ((0, Kp - K), (0, Np - N)))

    b2d = b.astype(jnp.float32).reshape(1, N)
    if Np != N:
        b2d = jnp.pad(b2d, ((0, 0), (0, Np - N)))

    # Per-lane mask / value rows encoding out[..., coords] = values.
    mask_vec = jnp.zeros((1, Np), dtype=jnp.int32)
    pert_vec = jnp.zeros((1, Np), dtype=jnp.float32)
    if coords is not None:
        coords = jnp.asarray(coords, dtype=jnp.int32)
        vals = jnp.broadcast_to(jnp.asarray(values, dtype=jnp.float32), coords.shape)
        mask_vec = mask_vec.at[0, coords].set(1)
        pert_vec = pert_vec.at[0, coords].set(vals)

    # VMEM limit: enough for the chosen tiles plus headroom, never above the
    # physical capacity (minus Mosaic internal scratch).
    vmem_limit = int(min(max(2 * tile_bytes(tm, tn), 32 * 2**20),
                         max(vmem_cap - 8 * 2**20, 32 * 2**20)))

    vec_spec_2d = pl.BlockSpec((1, tn), lambda i, j: (0, j))
    vec_spec_3d = pl.BlockSpec((1, tn), lambda i, j, k: (0, j))

    if not multi_k:
        # 2-D grid: dot + bias + select + store, no accumulator, no branches.
        # With tn == Np (or a constant block index), the weight tile is only
        # DMA'd when its block index changes, so small weights stay resident.
        kernel = _perturbed_linear_kernel_1k
        grid = (Mp // tm, Np // tn)
        in_specs = [
            pl.BlockSpec((tm, tk), lambda i, j: (i, 0)),   # x tile
            pl.BlockSpec((tk, tn), lambda i, j: (0, j)),   # w tile
            vec_spec_2d,                                   # bias
            vec_spec_2d,                                   # perturb mask
            vec_spec_2d,                                   # perturb values
        ]
        out_spec = pl.BlockSpec((tm, tn), lambda i, j: (i, j))
        scratch = []
        dims = ("parallel", "parallel")
    else:
        grid = (Mp // tm, Np // tn, Kp // tk)
        in_specs = [
            pl.BlockSpec((tm, tk), lambda i, j, k: (i, k)),   # x tile
            pl.BlockSpec((tk, tn), lambda i, j, k: (k, j)),   # w tile
            vec_spec_3d,                                      # bias
            vec_spec_3d,                                      # perturb mask
            vec_spec_3d,                                      # perturb values
        ]
        out_spec = pl.BlockSpec((tm, tn), lambda i, j, k: (i, j))
        if out_is_f32:
            kernel = _perturbed_linear_kernel_kacc            # accumulate in o_ref
            scratch = []
        else:
            kernel = _perturbed_linear_kernel_kscratch
            scratch = [pltpu.VMEM((tm, tn), jnp.float32)]
        dims = ("parallel", "parallel", "arbitrary")

    out2d = pl.pallas_call(
        kernel,
        out_shape=jax.ShapeDtypeStruct((Mp, Np), out_dtype),
        grid_spec=pltpu.PrefetchScalarGridSpec(
            num_scalar_prefetch=0,
            grid=grid,
            in_specs=in_specs,
            out_specs=out_spec,
            scratch_shapes=scratch,
        ),
        compiler_params=pltpu.CompilerParams(
            dimension_semantics=dims,
            vmem_limit_bytes=vmem_limit,
        ),
    )(x2d, w_p, b2d, mask_vec, pert_vec)

    if (Mp, Np) != (M, N):
        out2d = out2d[:M, :N]
    return out2d.reshape(B, S, N)


if __name__ == "__main__":
    # Small shapes consistent with the module's forward:
    # batch=2, seq=8, in_features=32, out_features=128 (lane-dense last dim).
    B, S, K, N = 2, 8, 32, 128

    key = jax.random.PRNGKey(0)
    kx, kw, kb = jax.random.split(key, 3)
    x = jax.random.normal(kx, (B, S, K), dtype=jnp.float32)
    # Deterministic "Linear" parameters (synthetic, not a checkpoint).
    w = jax.random.normal(kw, (K, N), dtype=jnp.float32) * (1.0 / K ** 0.5)
    b = jax.random.normal(kb, (N,), dtype=jnp.float32) * 0.01

    # Perturbation: overwrite these output coordinates with these values.
    perturbation_coordinates = jnp.array([3, 17, 64, 100], dtype=jnp.int32)
    perturbation_values = jnp.array([0.0, -1.5, 2.0, 7.25], dtype=jnp.float32)

    out = perturbed_linear(x, w, b, perturbation_coordinates, perturbation_values)
    out = jax.block_until_ready(out)

    # Reference (pure JAX) of the PerturbedLayer(Linear) semantics, using the
    # same bf16 input quantization as the kernel so tolerances stay tight.
    xb = x.astype(jnp.bfloat16).astype(jnp.float32)
    wb = w.astype(jnp.bfloat16).astype(jnp.float32)
    ref = jnp.dot(xb.reshape(B * S, K), wb,
                  precision=jax.lax.Precision.HIGHEST) + b[None, :]
    ref = ref.reshape(B, S, N)
    ref = ref.at[..., perturbation_coordinates].set(perturbation_values)

    assert out.shape == (B, S, N)
    assert jnp.allclose(out, ref, atol=1e-2, rtol=1e-2), float(
        jnp.max(jnp.abs(out - ref)))
    # The fancy-index overwrite itself must be exact (f32 output path).
    assert bool(jnp.all(out[..., perturbation_coordinates] == perturbation_values))

    # TODO(synk): the tuple-output branch of PerturbedLayer (when the wrapped
    # layer returns a tuple) is host-side control flow, not a kernel concern.

    print("KERNEL_OK")
</pallas_src>

<mosaic_0001>
module attributes {stable_mosaic.version = 11 : i64} {
  func.func @_perturbed_linear_kernel_1k(%arg0: i32, %arg1: i32, %arg2: memref<16x32xbf16, #tpu.memory_space<vmem>>, %arg3: memref<32x128xbf16, #tpu.memory_space<vmem>>, %arg4: memref<1x128xf32, #tpu.memory_space<vmem>>, %arg5: memref<1x128xi32, #tpu.memory_space<vmem>>, %arg6: memref<1x128xf32, #tpu.memory_space<vmem>>, %arg7: memref<16x128xf32, #tpu.memory_space<vmem>>) attributes {dimension_semantics = [#tpu.dimension_semantics<parallel>, #tpu.dimension_semantics<parallel>], iteration_bounds = array<i64: 1, 1>, scalar_prefetch = 0 : i64, scratch_operands = 0 : i64, tpu.core_type = #tpu.core_type<tc>, window_params = [{transform_indices = @transform_0, window_bounds = array<i64: 16, 32>}, {transform_indices = @transform_1, window_bounds = array<i64: 32, 128>}, {transform_indices = @transform_2, window_bounds = array<i64: 1, 128>}, {transform_indices = @transform_3, window_bounds = array<i64: 1, 128>}, {transform_indices = @transform_4, window_bounds = array<i64: 1, 128>}, {transform_indices = @transform_5, window_bounds = array<i64: 16, 128>}]} {
    %c0 = arith.constant 0 : index
    %c0_0 = arith.constant 0 : index
    %0 = vector.load %arg2[%c0, %c0_0] : memref<16x32xbf16, #tpu.memory_space<vmem>>, vector<16x32xbf16>
    %c0_1 = arith.constant 0 : index
    %c0_2 = arith.constant 0 : index
    %1 = vector.load %arg3[%c0_1, %c0_2] : memref<32x128xbf16, #tpu.memory_space<vmem>>, vector<32x128xbf16>
    %cst = arith.constant dense<0.000000e+00> : vector<16x128xf32>
    %2 = tpu.matmul %0, %1, %cst {dimension_numbers = #tpu.dot_dimension_numbers<[1], [0], [0], [1], [0, 0, 1, 1], [], []>} : vector<16x32xbf16>, vector<32x128xbf16>, vector<16x128xf32> -> vector<16x128xf32>
    %c0_3 = arith.constant 0 : index
    %c0_4 = arith.constant 0 : index
    %3 = vector.load %arg4[%c0_3, %c0_4] : memref<1x128xf32, #tpu.memory_space<vmem>>, vector<1x128xf32>
    %4 = vector.broadcast %3 : vector<1x128xf32> to vector<16x128xf32>
    %5 = arith.addf %2, %4 : vector<16x128xf32>
    %c0_5 = arith.constant 0 : index
    %c0_6 = arith.constant 0 : index
    %6 = vector.load %arg5[%c0_5, %c0_6] : memref<1x128xi32, #tpu.memory_space<vmem>>, vector<1x128xi32>
    %c0_i32 = arith.constant 0 : i32
    %7 = vector.broadcast %c0_i32 : i32 to vector<1x128xi32>
    %8 = arith.cmpi sgt, %6, %7 : vector<1x128xi32>
    %c0_7 = arith.constant 0 : index
    %c0_8 = arith.constant 0 : index
    %9 = vector.load %arg6[%c0_7, %c0_8] : memref<1x128xf32, #tpu.memory_space<vmem>>, vector<1x128xf32>
    %10 = vector.shape_cast %8 : vector<1x128xi1> to vector<1x128xi1>
    %11 = vector.broadcast %10 : vector<1x128xi1> to vector<16x128xi1>
    %12 = vector.shape_cast %9 : vector<1x128xf32> to vector<1x128xf32>
    %13 = vector.broadcast %12 : vector<1x128xf32> to vector<16x128xf32>
    %14 = arith.select %11, %13, %5 : vector<16x128xi1>, vector<16x128xf32>
    %c0_9 = arith.constant 0 : index
    %c0_10 = arith.constant 0 : index
    %15 = vector.load %arg7[%c0_9, %c0_10] : memref<16x128xf32, #tpu.memory_space<vmem>>, vector<16x128xf32>
    tpu.vector_store %arg7[%c0_9, %c0_10], %14 {strides = array<i32>} : memref<16x128xf32, #tpu.memory_space<vmem>>, vector<16x128xf32>,
    return
  }
  func.func @transform_0(%arg0: i32, %arg1: i32) -> (i32, i32) {
    %c0_i32 = arith.constant 0 : i32
    %c0_i32_0 = arith.constant 0 : i32
    return %arg0, %c0_i32 : i32, i32
  }
  func.func @transform_1(%arg0: i32, %arg1: i32) -> (i32, i32) {
    %c0_i32 = arith.constant 0 : i32
    %c0_i32_0 = arith.constant 0 : i32
    return %c0_i32, %arg1 : i32, i32
  }
  func.func @transform_2(%arg0: i32, %arg1: i32) -> (i32, i32) {
    %c0_i32 = arith.constant 0 : i32
    %c0_i32_0 = arith.constant 0 : i32
    return %c0_i32, %arg1 : i32, i32
  }
  func.func @transform_3(%arg0: i32, %arg1: i32) -> (i32, i32) {
    %c0_i32 = arith.constant 0 : i32
    %c0_i32_0 = arith.constant 0 : i32
    return %c0_i32, %arg1 : i32, i32
  }
  func.func @transform_4(%arg0: i32, %arg1: i32) -> (i32, i32) {
    %c0_i32 = arith.constant 0 : i32
    %c0_i32_0 = arith.constant 0 : i32
    return %c0_i32, %arg1 : i32, i32
  }
  func.func @transform_5(%arg0: i32, %arg1: i32) -> (i32, i32) {
    %c0_i32 = arith.constant 0 : i32
    return %arg0, %arg1 : i32, i32
  }
}

</mosaic_0001>

<llo_original>
// kernel: tpu_custom_call.1
$region0: #{tpu_custom_call.1}
  #allocation0 [shape = 'u32[]', space=smem, size = 0x4, offset = 0x4, fixed_abs, tag = 'smem constant byte address 0x4 - core index']
  #allocation1 [shape = 'u32[72,128]{1,0:T(1,128)}', space=vmem, size = 0x9000, scoped, tag = 'internal scratch']
  %s0 = inlined_call_operand.hbm [shape: bf16[16,32], index: 0, kind: input, shape index: {}]
  %s1 = inlined_call_operand.hbm [shape: bf16[32,128], index: 1, kind: input, shape index: {}]
  %s2 = inlined_call_operand.vmem [shape: f32[1,128], index: 2, kind: input, shape index: {}]
  %s3 = inlined_call_operand.vmem [shape: s32[1,128], index: 3, kind: input, shape index: {}]
  %s4 = inlined_call_operand.vmem [shape: f32[1,128], index: 4, kind: input, shape index: {}]
  %s5 = inlined_call_operand.hbm [shape: f32[16,128], index: 5, kind: output, shape index: {}]
  %s6 = sld [smem:[#allocation0]]
  $region38: #{tpu_custom_call.1} parent=0
    _
  %s8 = ssub.s32 1, %s6
  %s9 = scalar_select 0, %s8, %s6
  $region1: #{tpu_custom_call.1} parent=0
    #allocation2 [shape = 'u8[4096]{0}', space=vmem, size = 0x1000, scoped, tag = 'input window, operand 0, single buffered']
    #allocation3 [shape = 's32[1]{0}', space=sflag, size = 0x4, scoped, tag = 'scoped memory for tpu_custom_call.1']
    #allocation4 [shape = 's32[1]{0}', space=sflag, size = 0x4, scoped, tag = 'scoped memory for tpu_custom_call.1']
    #allocation5 [shape = 'u8[8192]{0}', space=vmem, size = 0x2000, scoped, tag = 'input window, operand 1, single buffered']
    #allocation6 [shape = 's32[1]{0}', space=sflag, size = 0x4, scoped, tag = 'scoped memory for tpu_custom_call.1']
    #allocation7 [shape = 'u8[8192]{0}', space=vmem, size = 0x2000, scoped, tag = 'output window, operand 0, single buffered']
    %10 = vsyncpa [#allocation3], 0
    %11 = vsyncpa [#allocation6], 0
    %12 = vsyncpa [#allocation4], 0
    // Predicated region
    $region2: #{tpu_custom_call.1} parent=1 // pred_check
      _
    $region3: #{tpu_custom_call.1} parent=1 // pred_check_branch
      %14 = sbr.rel (0) target = $region5
    $region4: #{tpu_custom_call.1} parent=1 // pred_region
      %16 = vsyncadd [#allocation3], 0
      %s17 = sshll.u32 %s0, 4
      %s18 = int_to_ptr.hbm [resolvable:$true] %s17
      %s19 = sshll.u32 [#allocation2], 4
      %s20 = int_to_ptr.vmem [resolvable:$true] %s19
      %25 = dma.hbm_to_vmem [thread:$0]  %s18, 128, %s20, [#allocation3], 64, 64, 4
    $region5: #{tpu_custom_call.1} parent=1 // pred_fallthru
      _
    // Predicated region
    $region6: #{tpu_custom_call.1} parent=1 // pred_check
      _
    $region7: #{tpu_custom_call.1} parent=1 // pred_check_branch
      %27 = sbr.rel (0) target = $region9
    $region8: #{tpu_custom_call.1} parent=1 // pred_region
      %29 = vsyncadd [#allocation6], 0
      %s30 = sshll.u32 %s1, 4
      %s31 = int_to_ptr.hbm [resolvable:$true] %s30
      %s32 = sshll.u32 [#allocation5], 4
      %s33 = int_to_ptr.vmem [resolvable:$true] %s32
      %38 = dma.hbm_to_vmem [thread:$0]  %s31, 256, %s33, [#allocation6], 64, 64, 4
    $region9: #{tpu_custom_call.1} parent=1 // pred_fallthru
      _
    // Predicated region
    $region10: #{tpu_custom_call.1} parent=1 // pred_check
      _
    $region11: #{tpu_custom_call.1} parent=1 // pred_check_branch
      %40 = sbr.rel (0) target = $region13
    $region12: #{tpu_custom_call.1} parent=1 // pred_region
      _
    $region13: #{tpu_custom_call.1} parent=1 // pred_fallthru
      _
    // Predicated region
    $region14: #{tpu_custom_call.1} parent=1 // pred_check
      _
    $region15: #{tpu_custom_call.1} parent=1 // pred_check_branch
      %42 = sbr.rel (0) target = $region17
    $region16: #{tpu_custom_call.1} parent=1 // pred_region
      _
    $region17: #{tpu_custom_call.1} parent=1 // pred_fallthru
      _
    // Predicated region
    $region18: #{tpu_custom_call.1} parent=1 // pred_check
      _
    $region19: #{tpu_custom_call.1} parent=1 // pred_check_branch
      %44 = sbr.rel (0) target = $region21
    $region20: #{tpu_custom_call.1} parent=1 // pred_region
      _
    $region21: #{tpu_custom_call.1} parent=1 // pred_fallthru
      _
    // Predicated region
    $region22: #{tpu_custom_call.1} parent=1 // pred_check
      _
    $region23: #{tpu_custom_call.1} parent=1 // pred_check_branch
      %46 = sbr.rel (0) target = $region25
    $region24: #{tpu_custom_call.1} parent=1 // pred_region
      %48 = dma.done [#allocation3], 128
    $region25: #{tpu_custom_call.1} parent=1 // pred_fallthru
      _
    // Predicated region
    $region26: #{tpu_custom_call.1} parent=1 // pred_check
      _
    $region27: #{tpu_custom_call.1} parent=1 // pred_check_branch
      %50 = sbr.rel (0) target = $region29
    $region28: #{tpu_custom_call.1} parent=1 // pred_region
      %52 = dma.done [#allocation6], 256
    $region29: #{tpu_custom_call.1} parent=1 // pred_fallthru
      _
    %v54 = vld [vmem:[#allocation2] sm:$0xf]
    %v55 = vld [vmem:[#allocation2 + $0x4] sm:$0xf]
    %v56 = vld [vmem:[#allocation5] sm:$0xf]
    %v57 = vld [vmem:[#allocation5 + $0x4] sm:$0xf]
    %v58 = vld [vmem:[#allocation5 + $0x8] sm:$0xf]
    %v59 = vld [vmem:[#allocation5 + $0xc] sm:$0xf]
    %v60 = vld [vmem:[%s2] sm:$0x1]
    %v62 = vperm.slane %v60, 0
    %v66 = vunpack.c.l.b16 %v54
    %v67 = vunpack.c.l.b16 %v55
    %v68 = vpack.c.b16 %v67, %v66
    %v73 = vunpack.c.l.b16 %v56
    %v74 = vunpack.c.l.b16 %v57
    %v75 = vunpack.c.l.b16 %v58
    %v76 = vunpack.c.l.b16 %v59
    %v77 = vpack.c.b16 %v74, %v73
    %v78 = vpack.c.b16 %v76, %v75
    %vm81 = vcmask 261120
    %v83 = vsel %vm81, %v68, 0
    %85 = vmatpush.bf16.msra.mxu0 0
    %86 = vmatpush.bf16.msra.mxu0 0
    %87 = vmatpush.bf16.msra.mxu0 0
    %88 = vmatpush.bf16.msra.mxu0 0
    %89 = vmatpush.bf16.msra.mxu0 0
    %90 = vmatpush.bf16.msra.mxu0 0
    %91 = vmatpush.bf16.msra.mxu0 %v78
    %92 = vmatpush.bf16.msra.mxu0 %v77
    %93 = vmatmul.bf16.gmra.mxu0 %v83
    %v94 = vpop.f32.mrf.mxu0
    %v95 = vadd.f32 %v62, %v94
    %v96 = vpop.f32.mrf.mxu0
    %v97 = vadd.f32 %v62, %v96
    %98 = vdwg.mxu0
    %v99 = vld [vmem:[%s3] sm:$0x1]
    %vm100 = vcmp.gt.s32.totalorder %v99, 0
    %v101 = vld [vmem:[%s4] sm:$0x1]
    %v102 = vsel %vm100, 1, 0
    %v103 = vperm.slane %v102, 0
    %vm104 = vcmp.eq.s32.totalorder %v103, 1
    %v106 = vperm.slane %v101, 0
    %v108 = vsel %vm104, %v106, %v95
    %v109 = vsel %vm104, %v106, %v97
    %110 = vst [vmem:[#allocation7] sm:$0xff] %v108
    %111 = vst [vmem:[#allocation7 + $0x8] sm:$0xff] %v109
    // Predicated region
    $region30: #{tpu_custom_call.1} parent=1 // pred_check
      _
    $region31: #{tpu_custom_call.1} parent=1 // pred_check_branch
      %113 = sbr.rel (0) target = $region33
    $region32: #{tpu_custom_call.1} parent=1 // pred_region
      %115 = vsyncadd [#allocation4], 0
      %s116 = sshll.u32 [#allocation7], 4
      %s117 = int_to_ptr.vmem [resolvable:$true] %s116
      %s118 = sshll.u32 %s5, 4
      %s119 = int_to_ptr.hbm [resolvable:$true] %s118
      %124 = dma.vmem_to_hbm [thread:$0]  %s117, 256, %s119, [#allocation4], 128, 128, 8
    $region33: #{tpu_custom_call.1} parent=1 // pred_fallthru
      _
    // Predicated region
    $region34: #{tpu_custom_call.1} parent=1 // pred_check
      _
    $region35: #{tpu_custom_call.1} parent=1 // pred_check_branch
      %126 = sbr.rel (0) target = $region37
    $region36: #{tpu_custom_call.1} parent=1 // pred_region
      %128 = dma.done [#allocation4], 256
    $region37: #{tpu_custom_call.1} parent=1 // pred_fallthru
      _
    %129 = vsyncpa [#allocation3], 1
    %130 = vsyncpa [#allocation6], 1
    %131 = vsyncpa [#allocation4], 1

</llo_original>
